<compile_context>
chip_gen: v6e
topology: v6e:2x2x1
jax: 0.10.0
libtpu: 0.0.40
codegen_flags: <defaults>
</compile_context>

<pallas_src>
import jax
import jax.numpy as jnp
from jax import lax
from jax.experimental import pallas as pl
from jax.experimental.pallas import tpu as pltpu

# ------------------------- problem sizes -------------------------
N, C_IN, H, W = 2, 4, 16, 16
KSZ = 3
PAD = KSZ // 2             # SAME padding for 3x3 stride-1
F_OUT = 8                  # ext output channels
NUM_CLASSES = 4            # head output (e.g. 4 rotation classes)
HW = H * W

HP = H + 2 * PAD           # padded height (18)
WP = W + 2 * PAD           # padded width  (18)
LANE_IN = WP * C_IN        # flattened padded row width  (72)
LANE_OUT = W * F_OUT       # flattened conv-output row width (128) -> lane dense
R = N * HP - 2 * PAD       # number of valid row-windows across the stacked batch (34)


# ------------------------- Pallas kernel -------------------------
def extractor_head_kernel(xp_ref, wband_ref, bconv_ref, pool_ref,
                          whead_ref, bhead_ref, out_ref):
    # xp_ref   : (N*HP, WP*C)        padded NHWC input, channels-last, flattened to 2D
    # wband_ref: (KSZ, WP*C, W*F)    banded conv weights, one slab per row tap dh
    # bconv_ref: (1, W*F)            conv bias tiled over the W output column blocks
    # pool_ref : (N, R)              block-of-ones row-selection matrix (per-image h-sum)
    # whead_ref: (W*F, NUM_CLASSES)  head weights tiled over W, pre-scaled by 1/HW
    # bhead_ref: (1, NUM_CLASSES)
    # out_ref  : (N, NUM_CLASSES)

    # Conv as 3 accumulated MXU matmuls (row taps); dw/c contraction is folded
    # into the banded weight slabs, so no im2col / reshape is needed in-kernel.
    acc = jnp.dot(xp_ref[pl.ds(0, R), :], wband_ref[0],
                  preferred_element_type=jnp.float32)            # (R, W*F)
    for dh in range(1, KSZ):
        acc = acc + jnp.dot(xp_ref[pl.ds(dh, R), :], wband_ref[dh],
                            preferred_element_type=jnp.float32)

    feat = jnp.maximum(acc + bconv_ref[...], 0.0)                # bias + ReLU

    # Global average pool + linear head:
    #  - sum over h on the MXU via the block-of-ones matrix (junk rows between
    #    images are selected out by zeros in pool_ref)
    #  - sum over w and the 1/HW scale are folded into the tiled head weights
    pooled = jnp.dot(pool_ref[...], feat,
                     preferred_element_type=jnp.float32)         # (N, W*F)
    logits = jnp.dot(pooled, whead_ref[...],
                     preferred_element_type=jnp.float32)         # (N, NUM_CLASSES)
    out_ref[...] = logits + bhead_ref[...]


# ------------------------- wrapper -------------------------
def extractor_head_forward(x_nchw, w_conv, b_conv, w_head, b_head):
    """x_nchw: [N, C_IN, H, W] float32. Returns logits [N, NUM_CLASSES]."""
    n, c, h, w = x_nchw.shape
    assert (n, c, h, w) == (N, C_IN, H, W)

    # ---- activations: NCHW -> NHWC -> pad -> flatten to a small 2D slab ----
    x_nhwc = jnp.transpose(x_nchw, (0, 2, 3, 1))                      # (N,H,W,C)
    xp = jnp.pad(x_nhwc, ((0, 0), (PAD, PAD), (PAD, PAD), (0, 0)))    # (N,HP,WP,C)
    xp2d = xp.reshape(n * HP, WP * C_IN)                              # (36, 72)

    # ---- weight prep (one-time; would be constant-folded in a real model) ----
    # Banded conv weights: for row-tap dh, B[dh] is (WP*C, W*F) with
    # B[dh][(wo+dw)*C + ci, wo*F + f] = w_conv[f, ci, dh, dw], so that
    #   window_dh @ B[dh]  performs the dw/ci contraction for all output columns.
    w_taps = jnp.transpose(w_conv, (2, 3, 1, 0))                      # (kH,kW,C,F)
    eye_w = jnp.eye(W, dtype=jnp.float32)
    slabs = []
    for dh in range(KSZ):
        slab = jnp.zeros((WP * C_IN, LANE_OUT), jnp.float32)
        for dw in range(KSZ):
            blk = jnp.kron(eye_w, w_taps[dh, dw])                     # (W*C, W*F)
            slab = slab + jnp.pad(
                blk, ((dw * C_IN, (2 * PAD - dw) * C_IN), (0, 0)))
        slabs.append(slab)
    w_band = jnp.stack(slabs, axis=0)                                 # (3, 72, 128)

    bias_row = jnp.tile(b_conv.reshape(1, F_OUT), (1, W))             # (1, 128)

    # Block-of-ones pooling matrix: selects each image's H valid rows.
    row_ids = jnp.arange(R)[None, :]                                  # (1, R)
    img_start = (jnp.arange(n) * HP)[:, None]                         # (N, 1)
    pool_mat = ((row_ids >= img_start) &
                (row_ids < img_start + H)).astype(jnp.float32)        # (N, R)

    # Head weights tiled over W (folds the w-sum of the pool) and pre-scaled
    # by 1/HW (folds the mean), so the kernel never does a mean/divide.
    w_head_big = jnp.tile(w_head, (W, 1)) / float(HW)                 # (128, 4)
    b_head_row = b_head.reshape(1, NUM_CLASSES)

    out = pl.pallas_call(
        extractor_head_kernel,
        out_shape=jax.ShapeDtypeStruct((n, NUM_CLASSES), jnp.float32),
        in_specs=[pl.BlockSpec(memory_space=pltpu.MemorySpace.VMEM)] * 6,
        out_specs=pl.BlockSpec(memory_space=pltpu.MemorySpace.VMEM),
    )(xp2d, w_band, bias_row, pool_mat, w_head_big, b_head_row)

    return out


# ------------------------- pure-JAX reference -------------------------
def reference_forward(x_nchw, w_conv, b_conv, w_head, b_head):
    feat = lax.conv_general_dilated(
        x_nchw, w_conv, window_strides=(1, 1), padding="SAME",
        dimension_numbers=("NCHW", "OIHW", "NCHW"))
    feat = feat + b_conv.reshape(1, F_OUT, 1, 1)
    feat = jnp.maximum(feat, 0.0)
    pooled = jnp.mean(feat, axis=(2, 3))            # (N, F)
    return pooled @ w_head + b_head                 # (N, NUM_CLASSES)


if __name__ == "__main__":
    key = jax.random.PRNGKey(0)
    k_x, k_wc, k_bc, k_wh, k_bh = jax.random.split(key, 5)

    x = jax.random.normal(k_x, (N, C_IN, H, W), dtype=jnp.float32)
    w_conv = jax.random.normal(k_wc, (F_OUT, C_IN, KSZ, KSZ), dtype=jnp.float32) * 0.1
    b_conv = jax.random.normal(k_bc, (F_OUT,), dtype=jnp.float32) * 0.1
    w_head = jax.random.normal(k_wh, (F_OUT, NUM_CLASSES), dtype=jnp.float32) * 0.1
    b_head = jax.random.normal(k_bh, (NUM_CLASSES,), dtype=jnp.float32) * 0.1

    fwd = jax.jit(extractor_head_forward)
    out = jax.block_until_ready(fwd(x, w_conv, b_conv, w_head, b_head))

    ref = reference_forward(x, w_conv, b_conv, w_head, b_head)
    assert out.shape == (N, NUM_CLASSES)
    assert jnp.allclose(out, ref, atol=1e-4, rtol=1e-4), (out, ref)

    print("KERNEL_OK")
</pallas_src>

<mosaic_0001>
module attributes {stable_mosaic.version = 11 : i64} {
  func.func @extractor_head_kernel(%arg0: memref<36x72xf32, #tpu.memory_space<vmem>>, %arg1: memref<3x72x128xf32, #tpu.memory_space<vmem>>, %arg2: memref<1x128xf32, #tpu.memory_space<vmem>>, %arg3: memref<2x34xf32, #tpu.memory_space<vmem>>, %arg4: memref<128x4xf32, #tpu.memory_space<vmem>>, %arg5: memref<1x4xf32, #tpu.memory_space<vmem>>, %arg6: memref<2x4xf32, #tpu.memory_space<vmem>>) attributes {dimension_semantics = [], scalar_prefetch = 0 : i64, scratch_operands = 0 : i64, tpu.core_type = #tpu.core_type<tc>} {
    %c0 = arith.constant 0 : index
    %c0_0 = arith.constant 0 : index
    %0 = vector.load %arg0[%c0, %c0_0] : memref<36x72xf32, #tpu.memory_space<vmem>>, vector<34x72xf32>
    %c0_1 = arith.constant 0 : index
    %c0_2 = arith.constant 0 : index
    %c0_3 = arith.constant 0 : index
    %1 = vector.load %arg1[%c0_1, %c0_2, %c0_3] : memref<3x72x128xf32, #tpu.memory_space<vmem>>, vector<1x72x128xf32>
    %2 = vector.shape_cast %1 : vector<1x72x128xf32> to vector<72x128xf32>
    %cst = arith.constant dense<0.000000e+00> : vector<34x128xf32>
    %3 = tpu.matmul %0, %2, %cst {dimension_numbers = #tpu.dot_dimension_numbers<[1], [0], [0], [1], [0, 0, 1, 1], [], []>} : vector<34x72xf32>, vector<72x128xf32>, vector<34x128xf32> -> vector<34x128xf32>
    %c1 = arith.constant 1 : index
    %c0_4 = arith.constant 0 : index
    %4 = vector.load %arg0[%c1, %c0_4] : memref<36x72xf32, #tpu.memory_space<vmem>>, vector<34x72xf32>
    %c1_5 = arith.constant 1 : index
    %c0_6 = arith.constant 0 : index
    %c0_7 = arith.constant 0 : index
    %5 = vector.load %arg1[%c1_5, %c0_6, %c0_7] : memref<3x72x128xf32, #tpu.memory_space<vmem>>, vector<1x72x128xf32>
    %6 = vector.shape_cast %5 : vector<1x72x128xf32> to vector<72x128xf32>
    %cst_8 = arith.constant dense<0.000000e+00> : vector<34x128xf32>
    %7 = tpu.matmul %4, %6, %cst_8 {dimension_numbers = #tpu.dot_dimension_numbers<[1], [0], [0], [1], [0, 0, 1, 1], [], []>} : vector<34x72xf32>, vector<72x128xf32>, vector<34x128xf32> -> vector<34x128xf32>
    %8 = arith.addf %3, %7 : vector<34x128xf32>
    %c2 = arith.constant 2 : index
    %c0_9 = arith.constant 0 : index
    %9 = vector.load %arg0[%c2, %c0_9] : memref<36x72xf32, #tpu.memory_space<vmem>>, vector<34x72xf32>
    %c2_10 = arith.constant 2 : index
    %c0_11 = arith.constant 0 : index
    %c0_12 = arith.constant 0 : index
    %10 = vector.load %arg1[%c2_10, %c0_11, %c0_12] : memref<3x72x128xf32, #tpu.memory_space<vmem>>, vector<1x72x128xf32>
    %11 = vector.shape_cast %10 : vector<1x72x128xf32> to vector<72x128xf32>
    %cst_13 = arith.constant dense<0.000000e+00> : vector<34x128xf32>
    %12 = tpu.matmul %9, %11, %cst_13 {dimension_numbers = #tpu.dot_dimension_numbers<[1], [0], [0], [1], [0, 0, 1, 1], [], []>} : vector<34x72xf32>, vector<72x128xf32>, vector<34x128xf32> -> vector<34x128xf32>
    %13 = arith.addf %8, %12 : vector<34x128xf32>
    %c0_14 = arith.constant 0 : index
    %c0_15 = arith.constant 0 : index
    %14 = vector.load %arg2[%c0_14, %c0_15] : memref<1x128xf32, #tpu.memory_space<vmem>>, vector<1x128xf32>
    %15 = vector.broadcast %14 : vector<1x128xf32> to vector<34x128xf32>
    %16 = arith.addf %13, %15 : vector<34x128xf32>
    %cst_16 = arith.constant 0.000000e+00 : f32
    %17 = vector.broadcast %cst_16 : f32 to vector<34x128xf32>
    %18 = arith.maximumf %16, %17 : vector<34x128xf32>
    %c0_17 = arith.constant 0 : index
    %c0_18 = arith.constant 0 : index
    %19 = vector.load %arg3[%c0_17, %c0_18] : memref<2x34xf32, #tpu.memory_space<vmem>>, vector<2x34xf32>
    %cst_19 = arith.constant dense<0.000000e+00> : vector<2x128xf32>
    %20 = tpu.matmul %19, %18, %cst_19 {dimension_numbers = #tpu.dot_dimension_numbers<[1], [0], [0], [1], [0, 0, 1, 1], [], []>} : vector<2x34xf32>, vector<34x128xf32>, vector<2x128xf32> -> vector<2x128xf32>
    %c0_20 = arith.constant 0 : index
    %c0_21 = arith.constant 0 : index
    %21 = vector.load %arg4[%c0_20, %c0_21] : memref<128x4xf32, #tpu.memory_space<vmem>>, vector<128x4xf32>
    %cst_22 = arith.constant dense<0.000000e+00> : vector<2x4xf32>
    %22 = tpu.matmul %20, %21, %cst_22 {dimension_numbers = #tpu.dot_dimension_numbers<[1], [0], [0], [1], [0, 0, 1, 1], [], []>} : vector<2x128xf32>, vector<128x4xf32>, vector<2x4xf32> -> vector<2x4xf32>
    %c0_23 = arith.constant 0 : index
    %c0_24 = arith.constant 0 : index
    %23 = vector.load %arg5[%c0_23, %c0_24] : memref<1x4xf32, #tpu.memory_space<vmem>>, vector<1x4xf32>
    %24 = vector.broadcast %23 : vector<1x4xf32> to vector<2x4xf32>
    %25 = arith.addf %22, %24 : vector<2x4xf32>
    %c0_25 = arith.constant 0 : index
    %c0_26 = arith.constant 0 : index
    %26 = vector.load %arg6[%c0_25, %c0_26] : memref<2x4xf32, #tpu.memory_space<vmem>>, vector<2x4xf32>
    tpu.vector_store %arg6[%c0_25, %c0_26], %25 {strides = array<i32>} : memref<2x4xf32, #tpu.memory_space<vmem>>, vector<2x4xf32>,
    return
  }
}

</mosaic_0001>

<llo_original>
// kernel: extractor_head_forward.1
$region0: #{extractor_head_forward.1}
  #allocation0 [shape = 'u32[]', space=smem, size = 0x4, offset = 0x4, fixed_abs, tag = 'smem constant byte address 0x4 - core index']
  #allocation1 [shape = 'u32[144,128]{1,0:T(1,128)}', space=vmem, size = 0x12000, scoped, tag = 'internal scratch']
  %s0 = inlined_call_operand.vmem [shape: f32[36,72], index: 0, kind: input, shape index: {}]
  %s1 = inlined_call_operand.vmem [shape: f32[3,72,128], index: 1, kind: input, shape index: {}]
  %s2 = inlined_call_operand.vmem [shape: f32[1,128], index: 2, kind: input, shape index: {}]
  %s3 = inlined_call_operand.vmem [shape: f32[2,34], index: 3, kind: input, shape index: {}]
  %s4 = inlined_call_operand.vmem [shape: f32[128,4], index: 4, kind: input, shape index: {}]
  %s5 = inlined_call_operand.vmem [shape: f32[1,4], index: 5, kind: input, shape index: {}]
  %s6 = inlined_call_operand.hbm [shape: f32[2,4], index: 6, kind: output, shape index: {}]
  %s7 = sld [smem:[#allocation0]]
  $region34: #{extractor_head_forward.1} parent=0
    _
  %s9 = ssub.s32 1, %s7
  %s10 = scalar_select 0, %s9, %s7
  $region1: #{extractor_head_forward.1} parent=0
    #allocation2 [shape = 'u8[1024]{0}', space=vmem, size = 0x400, scoped, tag = 'output window, operand 0, single buffered']
    #allocation3 [shape = 's32[1]{0}', space=sflag, size = 0x4, scoped, tag = 'scoped memory for extractor_head_forward.1']
    %11 = vsyncpa [#allocation3], 0
    // Predicated region
    $region2: #{extractor_head_forward.1} parent=1 // pred_check
      _
    $region3: #{extractor_head_forward.1} parent=1 // pred_check_branch
      %13 = sbr.rel (0) target = $region5
    $region4: #{extractor_head_forward.1} parent=1 // pred_region
      _
    $region5: #{extractor_head_forward.1} parent=1 // pred_fallthru
      _
    // Predicated region
    $region6: #{extractor_head_forward.1} parent=1 // pred_check
      _
    $region7: #{extractor_head_forward.1} parent=1 // pred_check_branch
      %15 = sbr.rel (0) target = $region9
    $region8: #{extractor_head_forward.1} parent=1 // pred_region
      _
    $region9: #{extractor_head_forward.1} parent=1 // pred_fallthru
      _
    // Predicated region
    $region10: #{extractor_head_forward.1} parent=1 // pred_check
      _
    $region11: #{extractor_head_forward.1} parent=1 // pred_check_branch
      %17 = sbr.rel (0) target = $region13
    $region12: #{extractor_head_forward.1} parent=1 // pred_region
      _
    $region13: #{extractor_head_forward.1} parent=1 // pred_fallthru
      _
    // Predicated region
    $region14: #{extractor_head_forward.1} parent=1 // pred_check
      _
    $region15: #{extractor_head_forward.1} parent=1 // pred_check_branch
      %19 = sbr.rel (0) target = $region17
    $region16: #{extractor_head_forward.1} parent=1 // pred_region
      _
    $region17: #{extractor_head_forward.1} parent=1 // pred_fallthru
      _
    // Predicated region
    $region18: #{extractor_head_forward.1} parent=1 // pred_check
      _
    $region19: #{extractor_head_forward.1} parent=1 // pred_check_branch
      %21 = sbr.rel (0) target = $region21
    $region20: #{extractor_head_forward.1} parent=1 // pred_region
      _
    $region21: #{extractor_head_forward.1} parent=1 // pred_fallthru
      _
    // Predicated region
    $region22: #{extractor_head_forward.1} parent=1 // pred_check
      _
    $region23: #{extractor_head_forward.1} parent=1 // pred_check_branch
      %23 = sbr.rel (0) target = $region25
    $region24: #{extractor_head_forward.1} parent=1 // pred_region
      _
    $region25: #{extractor_head_forward.1} parent=1 // pred_fallthru
      _
    %v24 = vld [vmem:[%s0] sm:$0xff]
    %v25 = vld [vmem:[%s0 + $0x8] sm:$0xff]
    %v26 = vld [vmem:[%s0 + $0x10] sm:$0xff]
    %v27 = vld [vmem:[%s0 + $0x18] sm:$0xff]
    %v28 = vld [vmem:[%s0 + $0x20] sm:$0x3]
    %v29 = vld [vmem:[%s1] sm:$0xff]
    %v30 = vld [vmem:[%s1 + $0x8] sm:$0xff]
    %v31 = vld [vmem:[%s1 + $0x10] sm:$0xff]
    %v32 = vld [vmem:[%s1 + $0x18] sm:$0xff]
    %v33 = vld [vmem:[%s1 + $0x20] sm:$0xff]
    %v34 = vld [vmem:[%s1 + $0x28] sm:$0xff]
    %v35 = vld [vmem:[%s1 + $0x30] sm:$0xff]
    %v36 = vld [vmem:[%s1 + $0x38] sm:$0xff]
    %v37 = vld [vmem:[%s1 + $0x40] sm:$0xff]
    %v38 = vld [vmem:[%s0 + $0x1] sm:$0xff]
    %v39 = vld [vmem:[%s0 + $0x9] sm:$0xff]
    %v40 = vld [vmem:[%s0 + $0x11] sm:$0xff]
    %v41 = vld [vmem:[%s0 + $0x19] sm:$0xff]
    %v42 = vld [vmem:[%s0 + $0x21] sm:$0x3]
    %s43 = scalar_lea.vmem %s1, 72
    %v44 = vld [vmem:[%s43] sm:$0xff]
    %v45 = vld [vmem:[%s43 + $0x8] sm:$0xff]
    %v46 = vld [vmem:[%s43 + $0x10] sm:$0xff]
    %v47 = vld [vmem:[%s43 + $0x18] sm:$0xff]
    %v48 = vld [vmem:[%s43 + $0x20] sm:$0xff]
    %v49 = vld [vmem:[%s43 + $0x28] sm:$0xff]
    %v50 = vld [vmem:[%s43 + $0x30] sm:$0xff]
    %v51 = vld [vmem:[%s43 + $0x38] sm:$0xff]
    %v52 = vld [vmem:[%s43 + $0x40] sm:$0xff]
    %vm53 = vcmask 588800
    %v55 = vsel %vm53, %v38, 0
    %v58 = vsel %vm53, %v39, 0
    %v61 = vsel %vm53, %v40, 0
    %v64 = vsel %vm53, %v41, 0
    %v67 = vsel %vm53, %v42, 0
    %69 = vmatprep.subr.mxu0 0.0
    %70 = vmatpush1.msra.mxu0 0.0
    %71 = vmatprep.subr.mxu0 0.0
    %72 = vmatpush1.msra.mxu0 0.0
    %73 = vmatprep.subr.mxu0 0.0
    %74 = vmatpush1.msra.mxu0 0.0
    %75 = vmatprep.subr.mxu0 0.0
    %76 = vmatpush1.msra.mxu0 0.0
    %77 = vmatprep.subr.mxu0 0.0
    %78 = vmatpush1.msra.mxu0 0.0
    %79 = vmatprep.subr.mxu0 0.0
    %80 = vmatpush1.msra.mxu0 0.0
    %81 = vmatprep.subr.mxu0 0.0
    %82 = vmatpush1.msra.mxu0 0.0
    %83 = vmatprep.subr.mxu0 0.0
    %84 = vmatpush1.msra.mxu0 %v52
    %85 = vmatprep.subr.mxu0 0.0
    %86 = vmatpush1.msra.mxu0 %v51
    %87 = vmatprep.subr.mxu0 0.0
    %88 = vmatpush1.msra.mxu0 %v50
    %89 = vmatprep.subr.mxu0 0.0
    %90 = vmatpush1.msra.mxu0 %v49
    %91 = vmatprep.subr.mxu0 0.0
    %92 = vmatpush1.msra.mxu0 %v48
    %93 = vmatprep.subr.mxu0 0.0
    %94 = vmatpush1.msra.mxu0 %v47
    %95 = vmatprep.subr.mxu0 0.0
    %96 = vmatpush1.msra.mxu0 %v46
    %97 = vmatprep.subr.mxu0 0.0
    %98 = vmatpush1.msra.mxu0 %v45
    %99 = vmatprep.subr.mxu0 0.0
    %100 = vmatpush1.msra.mxu0 %v44
    %101 = vmatprep.subr.mxu0 0.0
    %102 = vmatpush2.msra.mxu0 0.0
    %103 = vmatprep.subr.mxu0 0.0
    %104 = vmatpush2.msra.mxu0 0.0
    %105 = vmatprep.subr.mxu0 0.0
    %106 = vmatpush2.msra.mxu0 0.0
    %107 = vmatprep.subr.mxu0 0.0
    %108 = vmatpush2.msra.mxu0 0.0
    %109 = vmatprep.subr.mxu0 0.0
    %110 = vmatpush2.msra.mxu0 0.0
    %111 = vmatprep.subr.mxu0 0.0
    %112 = vmatpush2.msra.mxu0 0.0
    %113 = vmatprep.subr.mxu0 0.0
    %114 = vmatpush2.msra.mxu0 0.0
    %115 = vmatprep.subr.mxu0 0.0
    %116 = vmatpush2.msra.mxu0 0.0
    %117 = vmatprep.subr.mxu0 0.0
    %118 = vmatpush2.msra.mxu0 0.0
    %119 = vmatprep.subr.mxu0 0.0
    %120 = vmatpush2.msra.mxu0 0.0
    %121 = vmatprep.subr.mxu0 0.0
    %122 = vmatpush2.msra.mxu0 0.0
    %123 = vmatprep.subr.mxu0 0.0
    %124 = vmatpush2.msra.mxu0 0.0
    %125 = vmatprep.subr.mxu0 0.0
    %126 = vmatpush2.msra.mxu0 0.0
    %127 = vmatprep.subr.mxu0 0.0
    %128 = vmatpush2.msra.mxu0 0.0
    %129 = vmatprep.subr.mxu0 0.0
    %130 = vmatpush2.msra.mxu0 0.0
    %131 = vmatprep.subr.mxu0 0.0
    %132 = vmatpush2.msra.mxu0 0.0
    %133 = vmatprep.mubr.f32.mxu0 0.0
    %134 = vmatmul.mubr.f32.gmra.mxu0 %v55
    %v135 = vpop.f32.mrf.mxu0
    %v136 = vadd.f32 0.0, %v135
    %v137 = vpop.f32.mrf.mxu0
    %138 = vmatprep.mubr.f32.mxu0 0.0
    %139 = vmatmul.mubr.f32.gmra.mxu0 %v58
    %v140 = vpop.f32.mrf.mxu0
    %v141 = vadd.f32 0.0, %v140
    %v142 = vpop.f32.mrf.mxu0
    %143 = vmatprep.mubr.f32.mxu0 0.0
    %144 = vmatmul.mubr.f32.gmra.mxu0 %v61
    %v145 = vpop.f32.mrf.mxu0
    %v146 = vadd.f32 0.0, %v145
    %v147 = vpop.f32.mrf.mxu0
    %148 = vmatprep.mubr.f32.mxu0 0.0
    %149 = vmatmul.mubr.f32.gmra.mxu0 %v64
    %v150 = vpop.f32.mrf.mxu0
    %v151 = vadd.f32 0.0, %v150
    %v152 = vpop.f32.mrf.mxu0
    %153 = vmatprep.mubr.f32.mxu0 0.0
    %154 = vmatmul.mubr.f32.gmra.mxu0 %v67
    %v155 = vpop.f32.mrf.mxu0
    %v156 = vadd.f32 0.0, %v155
    %v157 = vpop.f32.mrf.mxu0
    %158 = vdwg.mxu0
    %v160 = vsel %vm53, %v24, 0
    %v163 = vsel %vm53, %v25, 0
    %v166 = vsel %vm53, %v26, 0
    %v169 = vsel %vm53, %v27, 0
    %v172 = vsel %vm53, %v28, 0
    %174 = vmatprep.subr.mxu0 0.0
    %175 = vmatpush1.msra.mxu0 0.0
    %176 = vmatprep.subr.mxu0 0.0
    %177 = vmatpush1.msra.mxu0 0.0
    %178 = vmatprep.subr.mxu0 0.0
    %179 = vmatpush1.msra.mxu0 0.0
    %180 = vmatprep.subr.mxu0 0.0
    %181 = vmatpush1.msra.mxu0 0.0
    %182 = vmatprep.subr.mxu0 0.0
    %183 = vmatpush1.msra.mxu0 0.0
    %184 = vmatprep.subr.mxu0 0.0
    %185 = vmatpush1.msra.mxu0 0.0
    %186 = vmatprep.subr.mxu0 0.0
    %187 = vmatpush1.msra.mxu0 0.0
    %188 = vmatprep.subr.mxu0 0.0
    %189 = vmatpush1.msra.mxu0 %v37
    %190 = vmatprep.subr.mxu0 0.0
    %191 = vmatpush1.msra.mxu0 %v36
    %192 = vmatprep.subr.mxu0 0.0
    %193 = vmatpush1.msra.mxu0 %v35
    %194 = vmatprep.subr.mxu0 0.0
    %195 = vmatpush1.msra.mxu0 %v34
    %196 = vmatprep.subr.mxu0 0.0
    %197 = vmatpush1.msra.mxu0 %v33
    %198 = vmatprep.subr.mxu0 0.0
    %199 = vmatpush1.msra.mxu0 %v32
    %200 = vmatprep.subr.mxu0 0.0
    %201 = vmatpush1.msra.mxu0 %v31
    %202 = vmatprep.subr.mxu0 0.0
    %203 = vmatpush1.msra.mxu0 %v30
    %204 = vmatprep.subr.mxu0 0.0
    %205 = vmatpush1.msra.mxu0 %v29
    %206 = vmatprep.subr.mxu0 0.0
    %207 = vmatpush2.msra.mxu0 0.0
    %208 = vmatprep.subr.mxu0 0.0
    %209 = vmatpush2.msra.mxu0 0.0
    %210 = vmatprep.subr.mxu0 0.0
    %211 = vmatpush2.msra.mxu0 0.0
    %212 = vmatprep.subr.mxu0 0.0
    %213 = vmatpush2.msra.mxu0 0.0
    %214 = vmatprep.subr.mxu0 0.0
    %215 = vmatpush2.msra.mxu0 0.0
    %216 = vmatprep.subr.mxu0 0.0
    %217 = vmatpush2.msra.mxu0 0.0
    %218 = vmatprep.subr.mxu0 0.0
    %219 = vmatpush2.msra.mxu0 0.0
    %220 = vmatprep.subr.mxu0 0.0
    %221 = vmatpush2.msra.mxu0 0.0
    %222 = vmatprep.subr.mxu0 0.0
    %223 = vmatpush2.msra.mxu0 0.0
    %224 = vmatprep.subr.mxu0 0.0
    %225 = vmatpush2.msra.mxu0 0.0
    %226 = vmatprep.subr.mxu0 0.0
    %227 = vmatpush2.msra.mxu0 0.0
    %228 = vmatprep.subr.mxu0 0.0
    %229 = vmatpush2.msra.mxu0 0.0
    %230 = vmatprep.subr.mxu0 0.0
    %231 = vmatpush2.msra.mxu0 0.0
    %232 = vmatprep.subr.mxu0 0.0
    %233 = vmatpush2.msra.mxu0 0.0
    %234 = vmatprep.subr.mxu0 0.0
    %235 = vmatpush2.msra.mxu0 0.0
    %236 = vmatprep.subr.mxu0 0.0
    %237 = vmatpush2.msra.mxu0 0.0
    %238 = vmatprep.mubr.f32.mxu0 0.0
    %239 = vmatmul.mubr.f32.gmra.mxu0 %v160
    %v240 = vpop.f32.mrf.mxu0
    %v241 = vadd.f32 %v136, %v240
    %v242 = vpop.f32.mrf.mxu0
    %243 = vmatprep.mubr.f32.mxu0 0.0
    %244 = vmatmul.mubr.f32.gmra.mxu0 %v163
    %v245 = vpop.f32.mrf.mxu0
    %v246 = vadd.f32 %v141, %v245
    %v247 = vpop.f32.mrf.mxu0
    %248 = vmatprep.mubr.f32.mxu0 0.0
    %249 = vmatmul.mubr.f32.gmra.mxu0 %v166
    %v250 = vpop.f32.mrf.mxu0
    %v251 = vadd.f32 %v146, %v250
    %v252 = vpop.f32.mrf.mxu0
    %253 = vmatprep.mubr.f32.mxu0 0.0
    %254 = vmatmul.mubr.f32.gmra.mxu0 %v169
    %v255 = vpop.f32.mrf.mxu0
    %v256 = vadd.f32 %v151, %v255
    %v257 = vpop.f32.mrf.mxu0
    %258 = vmatprep.mubr.f32.mxu0 0.0
    %259 = vmatmul.mubr.f32.gmra.mxu0 %v172
    %v260 = vpop.f32.mrf.mxu0
    %v261 = vadd.f32 %v156, %v260
    %v262 = vpop.f32.mrf.mxu0
    %263 = vdwg.mxu0
    %v264 = vld [vmem:[%s0 + $0x2] sm:$0xff]
    %v265 = vld [vmem:[%s0 + $0xa] sm:$0xff]
    %v266 = vld [vmem:[%s0 + $0x12] sm:$0xff]
    %v267 = vld [vmem:[%s0 + $0x1a] sm:$0xff]
    %v268 = vld [vmem:[%s0 + $0x22] sm:$0x3]
    %s269 = scalar_lea.vmem %s1, 144
    %v270 = vld [vmem:[%s269] sm:$0xff]
    %v271 = vld [vmem:[%s269 + $0x8] sm:$0xff]
    %v272 = vld [vmem:[%s269 + $0x10] sm:$0xff]
    %v273 = vld [vmem:[%s269 + $0x18] sm:$0xff]
    %v274 = vld [vmem:[%s269 + $0x20] sm:$0xff]
    %v275 = vld [vmem:[%s269 + $0x28] sm:$0xff]
    %v276 = vld [vmem:[%s269 + $0x30] sm:$0xff]
    %v277 = vld [vmem:[%s269 + $0x38] sm:$0xff]
    %v278 = vld [vmem:[%s269 + $0x40] sm:$0xff]
    %v280 = vsel %vm53, %v264, 0
    %v283 = vsel %vm53, %v265, 0
    %v286 = vsel %vm53, %v266, 0
    %v289 = vsel %vm53, %v267, 0
    %v292 = vsel %vm53, %v268, 0
    %294 = vmatprep.subr.mxu0 0.0
    %295 = vmatpush1.msra.mxu0 0.0
    %296 = vmatprep.subr.mxu0 0.0
    %297 = vmatpush1.msra.mxu0 0.0
    %298 = vmatprep.subr.mxu0 0.0
    %299 = vmatpush1.msra.mxu0 0.0
    %300 = vmatprep.subr.mxu0 0.0
    %301 = vmatpush1.msra.mxu0 0.0
    %302 = vmatprep.subr.mxu0 0.0
    %303 = vmatpush1.msra.mxu0 0.0
    %304 = vmatprep.subr.mxu0 0.0
    %305 = vmatpush1.msra.mxu0 0.0
    %306 = vmatprep.subr.mxu0 0.0
    %307 = vmatpush1.msra.mxu0 0.0
    %308 = vmatprep.subr.mxu0 0.0
    %309 = vmatpush1.msra.mxu0 %v278
    %310 = vmatprep.subr.mxu0 0.0
    %311 = vmatpush1.msra.mxu0 %v277
    %312 = vmatprep.subr.mxu0 0.0
    %313 = vmatpush1.msra.mxu0 %v276
    %314 = vmatprep.subr.mxu0 0.0
    %315 = vmatpush1.msra.mxu0 %v275
    %316 = vmatprep.subr.mxu0 0.0
    %317 = vmatpush1.msra.mxu0 %v274
    %318 = vmatprep.subr.mxu0 0.0
    %319 = vmatpush1.msra.mxu0 %v273
    %320 = vmatprep.subr.mxu0 0.0
    %321 = vmatpush1.msra.mxu0 %v272
    %322 = vmatprep.subr.mxu0 0.0
    %323 = vmatpush1.msra.mxu0 %v271
    %324 = vmatprep.subr.mxu0 0.0
    %325 = vmatpush1.msra.mxu0 %v270
    %326 = vmatprep.subr.mxu0 0.0
    %327 = vmatpush2.msra.mxu0 0.0
    %328 = vmatprep.subr.mxu0 0.0
    %329 = vmatpush2.msra.mxu0 0.0
    %330 = vmatprep.subr.mxu0 0.0
    %331 = vmatpush2.msra.mxu0 0.0
    %332 = vmatprep.subr.mxu0 0.0
    %333 = vmatpush2.msra.mxu0 0.0
    %334 = vmatprep.subr.mxu0 0.0
    %335 = vmatpush2.msra.mxu0 0.0
    %336 = vmatprep.subr.mxu0 0.0
    %337 = vmatpush2.msra.mxu0 0.0
    %338 = vmatprep.subr.mxu0 0.0
    %339 = vmatpush2.msra.mxu0 0.0
    %340 = vmatprep.subr.mxu0 0.0
    %341 = vmatpush2.msra.mxu0 0.0
    %342 = vmatprep.subr.mxu0 0.0
    %343 = vmatpush2.msra.mxu0 0.0
    %344 = vmatprep.subr.mxu0 0.0
    %345 = vmatpush2.msra.mxu0 0.0
    %346 = vmatprep.subr.mxu0 0.0
    %347 = vmatpush2.msra.mxu0 0.0
    %348 = vmatprep.subr.mxu0 0.0
    %349 = vmatpush2.msra.mxu0 0.0
    %350 = vmatprep.subr.mxu0 0.0
    %351 = vmatpush2.msra.mxu0 0.0
    %352 = vmatprep.subr.mxu0 0.0
    %353 = vmatpush2.msra.mxu0 0.0
    %354 = vmatprep.subr.mxu0 0.0
    %355 = vmatpush2.msra.mxu0 0.0
    %356 = vmatprep.subr.mxu0 0.0
    %357 = vmatpush2.msra.mxu0 0.0
    %358 = vmatprep.mubr.f32.mxu0 0.0
    %359 = vmatmul.mubr.f32.gmra.mxu0 %v280
    %v360 = vpop.f32.mrf.mxu0
    %v361 = vadd.f32 0.0, %v360
    %v362 = vpop.f32.mrf.mxu0
    %363 = vmatprep.mubr.f32.mxu0 0.0
    %364 = vmatmul.mubr.f32.gmra.mxu0 %v283
    %v365 = vpop.f32.mrf.mxu0
    %v366 = vadd.f32 0.0, %v365
    %v367 = vpop.f32.mrf.mxu0
    %368 = vmatprep.mubr.f32.mxu0 0.0
    %369 = vmatmul.mubr.f32.gmra.mxu0 %v286
    %v370 = vpop.f32.mrf.mxu0
    %v371 = vadd.f32 0.0, %v370
    %v372 = vpop.f32.mrf.mxu0
    %373 = vmatprep.mubr.f32.mxu0 0.0
    %374 = vmatmul.mubr.f32.gmra.mxu0 %v289
    %v375 = vpop.f32.mrf.mxu0
    %v376 = vadd.f32 0.0, %v375
    %v377 = vpop.f32.mrf.mxu0
    %378 = vmatprep.mubr.f32.mxu0 0.0
    %379 = vmatmul.mubr.f32.gmra.mxu0 %v292
    %v380 = vpop.f32.mrf.mxu0
    %v381 = vadd.f32 0.0, %v380
    %v382 = vpop.f32.mrf.mxu0
    %383 = vdwg.mxu0
    %v384 = vadd.f32 %v241, %v361
    %v385 = vadd.f32 %v246, %v366
    %v386 = vadd.f32 %v251, %v371
    %v387 = vadd.f32 %v256, %v376
    %v388 = vadd.f32 %v261, %v381
    %v389 = vld [vmem:[%s2] sm:$0x1]
    %v391 = vlaneseq
    %v392 = vshrl.u32 %v391, 7
    %v393 = vsub.s32 0, %v392
    %v394 = vrot.slane %v389, %v393
    %v396 = vadd.f32 %v384, %v394
    %v397 = vadd.f32 %v385, %v394
    %v398 = vadd.f32 %v386, %v394
    %v399 = vadd.f32 %v387, %v394
    %v400 = vadd.f32 %v388, %v394
    %v401 = vmax.f32 %v396, 0.0
    %v402 = vmax.f32 %v397, 0.0
    %v403 = vmax.f32 %v398, 0.0
    %v404 = vmax.f32 %v399, 0.0
    %v405 = vmax.f32 %v400, 0.0
    %v406 = vld [vmem:[%s3] sm:$0x3]
    %vm407 = vcmask 277504
    %v409 = vsel %vm407, %v406, 0
    %vm411 = vcmask 1041408
    %v413 = vsel %vm411, %v405, 0
    %415 = vmatprep.subr.mxu0 0.0
    %416 = vmatpush1.msra.mxu0 0.0
    %417 = vmatprep.subr.mxu0 0.0
    %418 = vmatpush1.msra.mxu0 0.0
    %419 = vmatprep.subr.mxu0 0.0
    %420 = vmatpush1.msra.mxu0 0.0
    %421 = vmatprep.subr.mxu0 0.0
    %422 = vmatpush1.msra.mxu0 0.0
    %423 = vmatprep.subr.mxu0 0.0
    %424 = vmatpush1.msra.mxu0 0.0
    %425 = vmatprep.subr.mxu0 0.0
    %426 = vmatpush1.msra.mxu0 0.0
    %427 = vmatprep.subr.mxu0 0.0
    %428 = vmatpush1.msra.mxu0 0.0
    %429 = vmatprep.subr.mxu0 0.0
    %430 = vmatpush1.msra.mxu0 0.0
    %431 = vmatprep.subr.mxu0 0.0
    %432 = vmatpush1.msra.mxu0 0.0
    %433 = vmatprep.subr.mxu0 0.0
    %434 = vmatpush1.msra.mxu0 0.0
    %435 = vmatprep.subr.mxu0 0.0
    %436 = vmatpush1.msra.mxu0 0.0
    %437 = vmatprep.subr.mxu0 0.0
    %438 = vmatpush1.msra.mxu0 %v413
    %439 = vmatprep.subr.mxu0 0.0
    %440 = vmatpush1.msra.mxu0 %v404
    %441 = vmatprep.subr.mxu0 0.0
    %442 = vmatpush1.msra.mxu0 %v403
    %443 = vmatprep.subr.mxu0 0.0
    %444 = vmatpush1.msra.mxu0 %v402
    %445 = vmatprep.subr.mxu0 0.0
    %446 = vmatpush1.msra.mxu0 %v401
    %447 = vmatprep.subr.mxu0 0.0
    %448 = vmatpush2.msra.mxu0 0.0
    %449 = vmatprep.subr.mxu0 0.0
    %450 = vmatpush2.msra.mxu0 0.0
    %451 = vmatprep.subr.mxu0 0.0
    %452 = vmatpush2.msra.mxu0 0.0
    %453 = vmatprep.subr.mxu0 0.0
    %454 = vmatpush2.msra.mxu0 0.0
    %455 = vmatprep.subr.mxu0 0.0
    %456 = vmatpush2.msra.mxu0 0.0
    %457 = vmatprep.subr.mxu0 0.0
    %458 = vmatpush2.msra.mxu0 0.0
    %459 = vmatprep.subr.mxu0 0.0
    %460 = vmatpush2.msra.mxu0 0.0
    %461 = vmatprep.subr.mxu0 0.0
    %462 = vmatpush2.msra.mxu0 0.0
    %463 = vmatprep.subr.mxu0 0.0
    %464 = vmatpush2.msra.mxu0 0.0
    %465 = vmatprep.subr.mxu0 0.0
    %466 = vmatpush2.msra.mxu0 0.0
    %467 = vmatprep.subr.mxu0 0.0
    %468 = vmatpush2.msra.mxu0 0.0
    %469 = vmatprep.subr.mxu0 0.0
    %470 = vmatpush2.msra.mxu0 0.0
    %471 = vmatprep.subr.mxu0 0.0
    %472 = vmatpush2.msra.mxu0 0.0
    %473 = vmatprep.subr.mxu0 0.0
    %474 = vmatpush2.msra.mxu0 0.0
    %475 = vmatprep.subr.mxu0 0.0
    %476 = vmatpush2.msra.mxu0 0.0
    %477 = vmatprep.subr.mxu0 0.0
    %478 = vmatpush2.msra.mxu0 0.0
    %479 = vmatprep.mubr.f32.mxu0 0.0
    %480 = vmatmul.mubr.f32.gmra.mxu0 %v409
    %v481 = vpop.f32.mrf.mxu0
    %v482 = vadd.f32 0.0, %v481
    %v483 = vpop.f32.mrf.mxu0
    %484 = vdwg.mxu0
    %v485 = vld [vmem:[%s4] sm:$0xff]
    %v486 = vld [vmem:[%s4 + $0x8] sm:$0xff]
    %v487 = vld [vmem:[%s4 + $0x10] sm:$0xff]
    %v488 = vld [vmem:[%s4 + $0x18] sm:$0xff]
    %v489 = vld [vmem:[%s4 + $0x20] sm:$0xff]
    %v490 = vld [vmem:[%s4 + $0x28] sm:$0xff]
    %v491 = vld [vmem:[%s4 + $0x30] sm:$0xff]
    %v492 = vld [vmem:[%s4 + $0x38] sm:$0xff]
    %v493 = vld [vmem:[%s4 + $0x40] sm:$0xff]
    %v494 = vld [vmem:[%s4 + $0x48] sm:$0xff]
    %v495 = vld [vmem:[%s4 + $0x50] sm:$0xff]
    %v496 = vld [vmem:[%s4 + $0x58] sm:$0xff]
    %v497 = vld [vmem:[%s4 + $0x60] sm:$0xff]
    %v498 = vld [vmem:[%s4 + $0x68] sm:$0xff]
    %v499 = vld [vmem:[%s4 + $0x70] sm:$0xff]
    %v500 = vld [vmem:[%s4 + $0x78] sm:$0xff]
    %v501 = vld [vmem:[%s5] sm:$0x1]
    %v503 = vlaneseq
    %v504 = vshrl.u32 %v503, 7
    %v505 = vsub.s32 0, %v504
    %v506 = vrot.slane %v501, %v505
    %508 = vmatprep.subr.mxu0 0.0
    %509 = vmatpush1.msra.mxu0 %v500
    %510 = vmatprep.subr.mxu0 0.0
    %511 = vmatpush1.msra.mxu0 %v499
    %512 = vmatprep.subr.mxu0 0.0
    %513 = vmatpush1.msra.mxu0 %v498
    %514 = vmatprep.subr.mxu0 0.0
    %515 = vmatpush1.msra.mxu0 %v497
    %516 = vmatprep.subr.mxu0 0.0
    %517 = vmatpush1.msra.mxu0 %v496
    %518 = vmatprep.subr.mxu0 0.0
    %519 = vmatpush1.msra.mxu0 %v495
    %520 = vmatprep.subr.mxu0 0.0
    %521 = vmatpush1.msra.mxu0 %v494
    %522 = vmatprep.subr.mxu0 0.0
    %523 = vmatpush1.msra.mxu0 %v493
    %524 = vmatprep.subr.mxu0 0.0
    %525 = vmatpush1.msra.mxu0 %v492
    %526 = vmatprep.subr.mxu0 0.0
    %527 = vmatpush1.msra.mxu0 %v491
    %528 = vmatprep.subr.mxu0 0.0
    %529 = vmatpush1.msra.mxu0 %v490
    %530 = vmatprep.subr.mxu0 0.0
    %531 = vmatpush1.msra.mxu0 %v489
    %532 = vmatprep.subr.mxu0 0.0
    %533 = vmatpush1.msra.mxu0 %v488
    %534 = vmatprep.subr.mxu0 0.0
    %535 = vmatpush1.msra.mxu0 %v487
    %536 = vmatprep.subr.mxu0 0.0
    %537 = vmatpush1.msra.mxu0 %v486
    %538 = vmatprep.subr.mxu0 0.0
    %539 = vmatpush1.msra.mxu0 %v485
    %540 = vmatprep.subr.mxu0 0.0
    %541 = vmatpush2.msra.mxu0 0.0
    %542 = vmatprep.subr.mxu0 0.0
    %543 = vmatpush2.msra.mxu0 0.0
    %544 = vmatprep.subr.mxu0 0.0
    %545 = vmatpush2.msra.mxu0 0.0
    %546 = vmatprep.subr.mxu0 0.0
    %547 = vmatpush2.msra.mxu0 0.0
    %548 = vmatprep.subr.mxu0 0.0
    %549 = vmatpush2.msra.mxu0 0.0
    %550 = vmatprep.subr.mxu0 0.0
    %551 = vmatpush2.msra.mxu0 0.0
    %552 = vmatprep.subr.mxu0 0.0
    %553 = vmatpush2.msra.mxu0 0.0
    %554 = vmatprep.subr.mxu0 0.0
    %555 = vmatpush2.msra.mxu0 0.0
    %556 = vmatprep.subr.mxu0 0.0
    %557 = vmatpush2.msra.mxu0 0.0
    %558 = vmatprep.subr.mxu0 0.0
    %559 = vmatpush2.msra.mxu0 0.0
    %560 = vmatprep.subr.mxu0 0.0
    %561 = vmatpush2.msra.mxu0 0.0
    %562 = vmatprep.subr.mxu0 0.0
    %563 = vmatpush2.msra.mxu0 0.0
    %564 = vmatprep.subr.mxu0 0.0
    %565 = vmatpush2.msra.mxu0 0.0
    %566 = vmatprep.subr.mxu0 0.0
    %567 = vmatpush2.msra.mxu0 0.0
    %568 = vmatprep.subr.mxu0 0.0
    %569 = vmatpush2.msra.mxu0 0.0
    %570 = vmatprep.subr.mxu0 0.0
    %571 = vmatpush2.msra.mxu0 0.0
    %572 = vmatprep.mubr.f32.mxu0 0.0
    %573 = vmatmul.mubr.f32.gmra.mxu0 %v482
    %v574 = vpop.f32.mrf.mxu0
    %v575 = vadd.f32 %v506, %v574
    %v576 = vpop.f32.mrf.mxu0
    %577 = vdwg.mxu0
    %vm578 = vcmask 25600
    %579 = vst.msk [vmem:[#allocation2] sm:$0x3] %vm578, %v575
    // Predicated region
    $region26: #{extractor_head_forward.1} parent=1 // pred_check
      _
    $region27: #{extractor_head_forward.1} parent=1 // pred_check_branch
      %581 = sbr.rel (0) target = $region29
    $region28: #{extractor_head_forward.1} parent=1 // pred_region
      %s583 = ssub.s32 32, 32
      %584 = vsyncadd [#allocation3], %s583
      %s586 = sshll.u32 [#allocation2], 4
      %s587 = int_to_ptr.vmem [resolvable:$true] %s586
      %589 = dma.vmem_to_hbm [thread:$0]  %s587, 32, %s6, [#allocation3]
    $region29: #{extractor_head_forward.1} parent=1 // pred_fallthru
      _
    // Predicated region
    $region30: #{extractor_head_forward.1} parent=1 // pred_check
      _
    $region31: #{extractor_head_forward.1} parent=1 // pred_check_branch
      %591 = sbr.rel (0) target = $region33
    $region32: #{extractor_head_forward.1} parent=1 // pred_region
      %592 = dma.done [#allocation3], 32
    $region33: #{extractor_head_forward.1} parent=1 // pred_fallthru
      _
    %593 = vsyncpa [#allocation3], 1

</llo_original>
